<compile_context>
chip_gen: v7x
topology: tpu7x:2x2x1
jax: 0.10.0
libtpu: 0.0.40
codegen_flags: <defaults>
</compile_context>

<pallas_src>
import functools

import jax
import jax.numpy as jnp
import numpy as np
from jax.experimental import pallas as pl
from jax.experimental.pallas import tpu as pltpu


def mha_kernel(claim_ref, sents_ref, wq_ref, wk_ref, wv_ref,
               bq_ref, bk_ref, bv_ref, rts_ref, rt_ref, wo_ref, bo_ref,
               out_ref, attw_ref, *, block_b, seq_len, inv_heads):
    Bt, S = block_b, seq_len
    E = claim_ref.shape[-1]
    H = rt_ref.shape[0]

    xc = claim_ref[...]                       # (Bt, E)    claim rows
    xs = sents_ref[...]                       # (Bt*S, E)  sentence rows

    # --- Q/K/V projections: batch folded into the MXU M dimension. ---
    q = jnp.dot(xc, wq_ref[...], preferred_element_type=jnp.float32) + bq_ref[...]   # (Bt, E)
    k = jnp.dot(xs, wk_ref[...], preferred_element_type=jnp.float32) + bk_ref[...]   # (Bt*S, E)
    v = jnp.dot(xs, wv_ref[...], preferred_element_type=jnp.float32) + bv_ref[...]   # (Bt*S, E)

    # --- Per-head scores via the head-membership mask (1/sqrt(Dh) folded into rts). ---
    prod = (q[:, None, :] * k.reshape(Bt, S, E)).reshape(Bt * S, E)                   # (Bt*S, E)
    scores = jnp.dot(prod, rts_ref[...],
                     preferred_element_type=jnp.float32).reshape(Bt, S, H)            # (Bt, S, H)

    # --- Softmax over keys (axis=1), exact f32. ---
    m = jnp.max(scores, axis=1, keepdims=True)                                        # (Bt, 1, H)
    p = jnp.exp(scores - m)                                                           # (Bt, S, H)
    attn = p / jnp.sum(p, axis=1, keepdims=True)                                      # (Bt, S, H)

    # --- Head-averaged attention weights: one dense (Bt, S) store. ---
    attw_ref[...] = jnp.sum(attn, axis=2) * inv_heads                                 # (Bt, S)

    # --- Context: expand per-head weights onto embedding lanes, reduce over S. ---
    w_lane = jnp.dot(attn.reshape(Bt * S, H), rt_ref[...],
                     preferred_element_type=jnp.float32)                              # (Bt*S, E)
    ctx = jnp.sum((w_lane * v).reshape(Bt, S, E), axis=1)                             # (Bt, E)

    # --- Output projection: one dense (Bt, E) store. ---
    out_ref[...] = (jnp.dot(ctx, wo_ref[...], preferred_element_type=jnp.float32)
                    + bo_ref[...])


def _pick_block_b(batch):
    # Fatter steps amortise the per-grid-step overhead; keep >= 2 steps when
    # the batch allows it so the v7x "parallel" axis can split across 2 TCs.
    # Block second-minor dims are either == batch or a multiple of 8, so the
    # (8, 128) BlockSpec constraint is always satisfied.
    if batch > 8 and batch % 8 == 0:
        return 8
    return batch


def multihead_attention(claim, sents, params, num_heads, block_b=None):
    B, E = claim.shape
    S = sents.shape[1]
    assert E % num_heads == 0, "embed_dim must be divisible by num_heads"
    Dh = E // num_heads
    scale = 1.0 / float(np.sqrt(Dh))

    if block_b is None:
        block_b = _pick_block_b(B)
    assert B % block_b == 0
    grid_b = B // block_b

    # Split the fused in_proj into lane-aligned (E, E) operands (x @ W^T layout).
    in_w = params["in_proj_weight"]                       # (3E, E)
    in_b = params["in_proj_bias"]                         # (3E,)
    wq = in_w[:E].T
    wk = in_w[E:2 * E].T
    wv = in_w[2 * E:].T
    bq = in_b[:E].reshape(1, E)
    bk = in_b[E:2 * E].reshape(1, E)
    bv = in_b[2 * E:].reshape(1, E)
    wo_t = params["out_proj_weight"].T                    # (E, E)
    bo = params["out_proj_bias"].reshape(1, E)            # (1, E)

    # Head-membership mask: rt[h, e] = 1 iff lane e belongs to head h.
    rt = jnp.repeat(jnp.eye(num_heads, dtype=jnp.float32), Dh, axis=1)    # (H, E)
    rts = (rt * scale).T                                                  # (E, H), scale folded in

    sents_flat = sents.reshape(B * S, E)   # free reshape; keeps every block 2D

    kernel = functools.partial(mha_kernel, block_b=block_b, seq_len=S,
                               inv_heads=1.0 / num_heads)

    wspec = pl.BlockSpec((E, E), lambda b: (0, 0))
    bspec = pl.BlockSpec((1, E), lambda b: (0, 0))

    out, attw = pl.pallas_call(
        kernel,
        out_shape=(jax.ShapeDtypeStruct((B, E), jnp.float32),
                   jax.ShapeDtypeStruct((B, S), jnp.float32)),
        grid_spec=pltpu.PrefetchScalarGridSpec(
            num_scalar_prefetch=0,
            grid=(grid_b,),
            in_specs=[
                pl.BlockSpec((block_b, E), lambda b: (b, 0)),        # claim rows
                pl.BlockSpec((block_b * S, E), lambda b: (b, 0)),    # sentence rows
                wspec, wspec, wspec,                                 # Wq, Wk, Wv
                bspec, bspec, bspec,                                 # bq, bk, bv
                pl.BlockSpec((E, num_heads), lambda b: (0, 0)),      # scaled head mask^T
                pl.BlockSpec((num_heads, E), lambda b: (0, 0)),      # head mask
                wspec,                                               # Wo^T
                bspec,                                               # bo
            ],
            out_specs=(
                pl.BlockSpec((block_b, E), lambda b: (b, 0)),        # attn output
                pl.BlockSpec((block_b, S), lambda b: (b, 0)),        # head-avg weights
            ),
        ),
        compiler_params=pltpu.CompilerParams(
            dimension_semantics=("parallel",)),
    )(claim, sents_flat, wq, wk, wv, bq, bk, bv, rts, rt, wo_t, bo)

    return out, attw[:, None, :]             # (B, E), (B, 1, S)


def ref_mha(claim, sents, params, num_heads):
    """float64 numpy reference matching nn.MultiheadAttention forward."""
    claim = np.asarray(claim, np.float64)
    sents = np.asarray(sents, np.float64)
    in_w = np.asarray(params["in_proj_weight"], np.float64)
    in_b = np.asarray(params["in_proj_bias"], np.float64)
    wo = np.asarray(params["out_proj_weight"], np.float64)
    bo = np.asarray(params["out_proj_bias"], np.float64)

    B, E = claim.shape
    S = sents.shape[1]
    H = num_heads
    Dh = E // H

    q = claim[:, None, :] @ in_w[:E].T + in_b[:E]
    k = sents @ in_w[E:2 * E].T + in_b[E:2 * E]
    v = sents @ in_w[2 * E:].T + in_b[2 * E:]

    qh = q.reshape(B, 1, H, Dh).transpose(0, 2, 1, 3)
    kh = k.reshape(B, S, H, Dh).transpose(0, 2, 1, 3)
    vh = v.reshape(B, S, H, Dh).transpose(0, 2, 1, 3)

    scores = (qh @ kh.transpose(0, 1, 3, 2)) / np.sqrt(Dh)
    scores = scores - scores.max(axis=-1, keepdims=True)
    attn = np.exp(scores)
    attn = attn / attn.sum(axis=-1, keepdims=True)

    ctx = (attn @ vh).transpose(0, 2, 1, 3).reshape(B, 1, E)
    out = ctx @ wo.T + bo
    return out[:, 0, :], attn.mean(axis=1)    # (B, E), (B, 1, S)


if __name__ == "__main__":
    B, S, E, H = 2, 8, 32, 4

    key = jax.random.PRNGKey(0)
    k1, k2, k3, k4, k5, k6 = jax.random.split(key, 6)

    claim = jax.random.normal(k1, (B, E), dtype=jnp.float32)
    sents = jax.random.normal(k2, (B, S, E), dtype=jnp.float32)

    params = {
        "in_proj_weight": jax.random.normal(k3, (3 * E, E), dtype=jnp.float32) * (1.0 / np.sqrt(E)),
        "in_proj_bias": jax.random.normal(k4, (3 * E,), dtype=jnp.float32) * 0.02,
        "out_proj_weight": jax.random.normal(k5, (E, E), dtype=jnp.float32) * (1.0 / np.sqrt(E)),
        "out_proj_bias": jax.random.normal(k6, (E,), dtype=jnp.float32) * 0.02,
    }

    out, attw = multihead_attention(claim, sents, params, H)
    jax.block_until_ready((out, attw))

    ref_out, ref_attw = ref_mha(claim, sents, params, H)
    np.testing.assert_allclose(np.asarray(out), ref_out, rtol=1e-5, atol=1e-5)
    np.testing.assert_allclose(np.asarray(attw), ref_attw, rtol=1e-5, atol=1e-5)

    print("KERNEL_OK")
</pallas_src>

<mosaic_0001>
module attributes {stable_mosaic.version = 11 : i64} {
  func.func @mha_kernel(%arg0: i32, %arg1: memref<2x32xf32, #tpu.memory_space<vmem>>, %arg2: memref<16x32xf32, #tpu.memory_space<vmem>>, %arg3: memref<32x32xf32, #tpu.memory_space<vmem>>, %arg4: memref<32x32xf32, #tpu.memory_space<vmem>>, %arg5: memref<32x32xf32, #tpu.memory_space<vmem>>, %arg6: memref<1x32xf32, #tpu.memory_space<vmem>>, %arg7: memref<1x32xf32, #tpu.memory_space<vmem>>, %arg8: memref<1x32xf32, #tpu.memory_space<vmem>>, %arg9: memref<32x4xf32, #tpu.memory_space<vmem>>, %arg10: memref<4x32xf32, #tpu.memory_space<vmem>>, %arg11: memref<32x32xf32, #tpu.memory_space<vmem>>, %arg12: memref<1x32xf32, #tpu.memory_space<vmem>>, %arg13: memref<2x32xf32, #tpu.memory_space<vmem>>, %arg14: memref<2x8xf32, #tpu.memory_space<vmem>>) attributes {dimension_semantics = [#tpu.dimension_semantics<parallel>], iteration_bounds = array<i64: 1>, scalar_prefetch = 0 : i64, scratch_operands = 0 : i64, tpu.core_type = #tpu.core_type<tc>, window_params = [{transform_indices = @transform_0, window_bounds = array<i64: 2, 32>}, {transform_indices = @transform_1, window_bounds = array<i64: 16, 32>}, {pipeline_mode = #tpu.pipeline_mode<synchronous>, transform_indices = @transform_2, window_bounds = array<i64: 32, 32>}, {pipeline_mode = #tpu.pipeline_mode<synchronous>, transform_indices = @transform_3, window_bounds = array<i64: 32, 32>}, {pipeline_mode = #tpu.pipeline_mode<synchronous>, transform_indices = @transform_4, window_bounds = array<i64: 32, 32>}, {pipeline_mode = #tpu.pipeline_mode<synchronous>, transform_indices = @transform_5, window_bounds = array<i64: 1, 32>}, {pipeline_mode = #tpu.pipeline_mode<synchronous>, transform_indices = @transform_6, window_bounds = array<i64: 1, 32>}, {pipeline_mode = #tpu.pipeline_mode<synchronous>, transform_indices = @transform_7, window_bounds = array<i64: 1, 32>}, {pipeline_mode = #tpu.pipeline_mode<synchronous>, transform_indices = @transform_8, window_bounds = array<i64: 32, 4>}, {pipeline_mode = #tpu.pipeline_mode<synchronous>, transform_indices = @transform_9, window_bounds = array<i64: 4, 32>}, {pipeline_mode = #tpu.pipeline_mode<synchronous>, transform_indices = @transform_10, window_bounds = array<i64: 32, 32>}, {pipeline_mode = #tpu.pipeline_mode<synchronous>, transform_indices = @transform_11, window_bounds = array<i64: 1, 32>}, {transform_indices = @transform_12, window_bounds = array<i64: 2, 32>}, {transform_indices = @transform_13, window_bounds = array<i64: 2, 8>}]} {
    %c0 = arith.constant 0 : index
    %c0_0 = arith.constant 0 : index
    %0 = vector.load %arg1[%c0, %c0_0] : memref<2x32xf32, #tpu.memory_space<vmem>>, vector<2x32xf32>
    %c0_1 = arith.constant 0 : index
    %c0_2 = arith.constant 0 : index
    %1 = vector.load %arg2[%c0_1, %c0_2] : memref<16x32xf32, #tpu.memory_space<vmem>>, vector<16x32xf32>
    %c0_3 = arith.constant 0 : index
    %c0_4 = arith.constant 0 : index
    %2 = vector.load %arg3[%c0_3, %c0_4] : memref<32x32xf32, #tpu.memory_space<vmem>>, vector<32x32xf32>
    %cst = arith.constant dense<0.000000e+00> : vector<2x32xf32>
    %3 = tpu.matmul %0, %2, %cst {dimension_numbers = #tpu.dot_dimension_numbers<[1], [0], [0], [1], [0, 0, 1, 1], [], []>} : vector<2x32xf32>, vector<32x32xf32>, vector<2x32xf32> -> vector<2x32xf32>
    %c0_5 = arith.constant 0 : index
    %c0_6 = arith.constant 0 : index
    %4 = vector.load %arg6[%c0_5, %c0_6] : memref<1x32xf32, #tpu.memory_space<vmem>>, vector<1x32xf32>
    %5 = vector.broadcast %4 : vector<1x32xf32> to vector<2x32xf32>
    %6 = arith.addf %3, %5 : vector<2x32xf32>
    %c0_7 = arith.constant 0 : index
    %c0_8 = arith.constant 0 : index
    %7 = vector.load %arg4[%c0_7, %c0_8] : memref<32x32xf32, #tpu.memory_space<vmem>>, vector<32x32xf32>
    %cst_9 = arith.constant dense<0.000000e+00> : vector<16x32xf32>
    %8 = tpu.matmul %1, %7, %cst_9 {dimension_numbers = #tpu.dot_dimension_numbers<[1], [0], [0], [1], [0, 0, 1, 1], [], []>} : vector<16x32xf32>, vector<32x32xf32>, vector<16x32xf32> -> vector<16x32xf32>
    %c0_10 = arith.constant 0 : index
    %c0_11 = arith.constant 0 : index
    %9 = vector.load %arg7[%c0_10, %c0_11] : memref<1x32xf32, #tpu.memory_space<vmem>>, vector<1x32xf32>
    %10 = vector.broadcast %9 : vector<1x32xf32> to vector<16x32xf32>
    %11 = arith.addf %8, %10 : vector<16x32xf32>
    %c0_12 = arith.constant 0 : index
    %c0_13 = arith.constant 0 : index
    %12 = vector.load %arg5[%c0_12, %c0_13] : memref<32x32xf32, #tpu.memory_space<vmem>>, vector<32x32xf32>
    %cst_14 = arith.constant dense<0.000000e+00> : vector<16x32xf32>
    %13 = tpu.matmul %1, %12, %cst_14 {dimension_numbers = #tpu.dot_dimension_numbers<[1], [0], [0], [1], [0, 0, 1, 1], [], []>} : vector<16x32xf32>, vector<32x32xf32>, vector<16x32xf32> -> vector<16x32xf32>
    %c0_15 = arith.constant 0 : index
    %c0_16 = arith.constant 0 : index
    %14 = vector.load %arg8[%c0_15, %c0_16] : memref<1x32xf32, #tpu.memory_space<vmem>>, vector<1x32xf32>
    %15 = vector.broadcast %14 : vector<1x32xf32> to vector<16x32xf32>
    %16 = arith.addf %13, %15 : vector<16x32xf32>
    %17 = vector.shape_cast %6 : vector<2x32xf32> to vector<2x1x32xf32>
    %18 = vector.shape_cast %11 : vector<16x32xf32> to vector<2x8x32xf32>
    %19 = vector.broadcast %17 : vector<2x1x32xf32> to vector<2x8x32xf32>
    %20 = arith.mulf %19, %18 : vector<2x8x32xf32>
    %21 = vector.shape_cast %20 : vector<2x8x32xf32> to vector<16x32xf32>
    %c0_17 = arith.constant 0 : index
    %c0_18 = arith.constant 0 : index
    %22 = vector.load %arg9[%c0_17, %c0_18] : memref<32x4xf32, #tpu.memory_space<vmem>>, vector<32x4xf32>
    %cst_19 = arith.constant dense<0.000000e+00> : vector<16x4xf32>
    %23 = tpu.matmul %21, %22, %cst_19 {dimension_numbers = #tpu.dot_dimension_numbers<[1], [0], [0], [1], [0, 0, 1, 1], [], []>} : vector<16x32xf32>, vector<32x4xf32>, vector<16x4xf32> -> vector<16x4xf32>
    %24 = vector.shape_cast %23 : vector<16x4xf32> to vector<2x8x4xf32>
    %cst_20 = arith.constant dense<0xFF800000> : vector<2x4xf32>
    %25 = vector.multi_reduction <maximumf>, %24, %cst_20 [1] : vector<2x8x4xf32> to vector<2x4xf32>
    %26 = vector.shape_cast %25 : vector<2x4xf32> to vector<2x1x4xf32>
    %27 = vector.broadcast %26 : vector<2x1x4xf32> to vector<2x8x4xf32>
    %28 = arith.subf %24, %27 : vector<2x8x4xf32>
    %29 = math.exp %28 : vector<2x8x4xf32>
    %cst_21 = arith.constant dense<0.000000e+00> : vector<2x4xf32>
    %30 = vector.multi_reduction <add>, %29, %cst_21 [1] : vector<2x8x4xf32> to vector<2x4xf32>
    %31 = vector.shape_cast %30 : vector<2x4xf32> to vector<2x1x4xf32>
    %32 = vector.broadcast %31 : vector<2x1x4xf32> to vector<2x8x4xf32>
    %33 = arith.divf %29, %32 : vector<2x8x4xf32>
    %cst_22 = arith.constant dense<0.000000e+00> : vector<2x8xf32>
    %34 = vector.multi_reduction <add>, %33, %cst_22 [2] : vector<2x8x4xf32> to vector<2x8xf32>
    %cst_23 = arith.constant 2.500000e-01 : f32
    %35 = vector.broadcast %cst_23 : f32 to vector<2x8xf32>
    %36 = arith.mulf %34, %35 : vector<2x8xf32>
    %c0_24 = arith.constant 0 : index
    %c0_25 = arith.constant 0 : index
    %37 = vector.load %arg14[%c0_24, %c0_25] : memref<2x8xf32, #tpu.memory_space<vmem>>, vector<2x8xf32>
    tpu.vector_store %arg14[%c0_24, %c0_25], %36 {strides = array<i32>} : memref<2x8xf32, #tpu.memory_space<vmem>>, vector<2x8xf32>,
    %38 = vector.shape_cast %33 : vector<2x8x4xf32> to vector<16x4xf32>
    %c0_26 = arith.constant 0 : index
    %c0_27 = arith.constant 0 : index
    %39 = vector.load %arg10[%c0_26, %c0_27] : memref<4x32xf32, #tpu.memory_space<vmem>>, vector<4x32xf32>
    %cst_28 = arith.constant dense<0.000000e+00> : vector<16x32xf32>
    %40 = tpu.matmul %38, %39, %cst_28 {dimension_numbers = #tpu.dot_dimension_numbers<[1], [0], [0], [1], [0, 0, 1, 1], [], []>} : vector<16x4xf32>, vector<4x32xf32>, vector<16x32xf32> -> vector<16x32xf32>
    %41 = arith.mulf %40, %16 : vector<16x32xf32>
    %42 = vector.shape_cast %41 : vector<16x32xf32> to vector<2x8x32xf32>
    %cst_29 = arith.constant dense<0.000000e+00> : vector<2x32xf32>
    %43 = vector.multi_reduction <add>, %42, %cst_29 [1] : vector<2x8x32xf32> to vector<2x32xf32>
    %c0_30 = arith.constant 0 : index
    %c0_31 = arith.constant 0 : index
    %44 = vector.load %arg11[%c0_30, %c0_31] : memref<32x32xf32, #tpu.memory_space<vmem>>, vector<32x32xf32>
    %cst_32 = arith.constant dense<0.000000e+00> : vector<2x32xf32>
    %45 = tpu.matmul %43, %44, %cst_32 {dimension_numbers = #tpu.dot_dimension_numbers<[1], [0], [0], [1], [0, 0, 1, 1], [], []>} : vector<2x32xf32>, vector<32x32xf32>, vector<2x32xf32> -> vector<2x32xf32>
    %c0_33 = arith.constant 0 : index
    %c0_34 = arith.constant 0 : index
    %46 = vector.load %arg12[%c0_33, %c0_34] : memref<1x32xf32, #tpu.memory_space<vmem>>, vector<1x32xf32>
    %47 = vector.broadcast %46 : vector<1x32xf32> to vector<2x32xf32>
    %48 = arith.addf %45, %47 : vector<2x32xf32>
    %c0_35 = arith.constant 0 : index
    %c0_36 = arith.constant 0 : index
    %49 = vector.load %arg13[%c0_35, %c0_36] : memref<2x32xf32, #tpu.memory_space<vmem>>, vector<2x32xf32>
    tpu.vector_store %arg13[%c0_35, %c0_36], %48 {strides = array<i32>} : memref<2x32xf32, #tpu.memory_space<vmem>>, vector<2x32xf32>,
    return
  }
  func.func @transform_0(%arg0: i32) -> (i32, i32) {
    %c0_i32 = arith.constant 0 : i32
    %c0_i32_0 = arith.constant 0 : i32
    return %arg0, %c0_i32 : i32, i32
  }
  func.func @transform_1(%arg0: i32) -> (i32, i32) {
    %c0_i32 = arith.constant 0 : i32
    %c0_i32_0 = arith.constant 0 : i32
    return %arg0, %c0_i32 : i32, i32
  }
  func.func @transform_2(%arg0: i32) -> (i32, i32) {
    %c0_i32 = arith.constant 0 : i32
    %c0_i32_0 = arith.constant 0 : i32
    %c0_i32_1 = arith.constant 0 : i32
    return %c0_i32, %c0_i32_0 : i32, i32
  }
  func.func @transform_3(%arg0: i32) -> (i32, i32) {
    %c0_i32 = arith.constant 0 : i32
    %c0_i32_0 = arith.constant 0 : i32
    %c0_i32_1 = arith.constant 0 : i32
    return %c0_i32, %c0_i32_0 : i32, i32
  }
  func.func @transform_4(%arg0: i32) -> (i32, i32) {
    %c0_i32 = arith.constant 0 : i32
    %c0_i32_0 = arith.constant 0 : i32
    %c0_i32_1 = arith.constant 0 : i32
    return %c0_i32, %c0_i32_0 : i32, i32
  }
  func.func @transform_5(%arg0: i32) -> (i32, i32) {
    %c0_i32 = arith.constant 0 : i32
    %c0_i32_0 = arith.constant 0 : i32
    %c0_i32_1 = arith.constant 0 : i32
    return %c0_i32, %c0_i32_0 : i32, i32
  }
  func.func @transform_6(%arg0: i32) -> (i32, i32) {
    %c0_i32 = arith.constant 0 : i32
    %c0_i32_0 = arith.constant 0 : i32
    %c0_i32_1 = arith.constant 0 : i32
    return %c0_i32, %c0_i32_0 : i32, i32
  }
  func.func @transform_7(%arg0: i32) -> (i32, i32) {
    %c0_i32 = arith.constant 0 : i32
    %c0_i32_0 = arith.constant 0 : i32
    %c0_i32_1 = arith.constant 0 : i32
    return %c0_i32, %c0_i32_0 : i32, i32
  }
  func.func @transform_8(%arg0: i32) -> (i32, i32) {
    %c0_i32 = arith.constant 0 : i32
    %c0_i32_0 = arith.constant 0 : i32
    %c0_i32_1 = arith.constant 0 : i32
    return %c0_i32, %c0_i32_0 : i32, i32
  }
  func.func @transform_9(%arg0: i32) -> (i32, i32) {
    %c0_i32 = arith.constant 0 : i32
    %c0_i32_0 = arith.constant 0 : i32
    %c0_i32_1 = arith.constant 0 : i32
    return %c0_i32, %c0_i32_0 : i32, i32
  }
  func.func @transform_10(%arg0: i32) -> (i32, i32) {
    %c0_i32 = arith.constant 0 : i32
    %c0_i32_0 = arith.constant 0 : i32
    %c0_i32_1 = arith.constant 0 : i32
    return %c0_i32, %c0_i32_0 : i32, i32
  }
  func.func @transform_11(%arg0: i32) -> (i32, i32) {
    %c0_i32 = arith.constant 0 : i32
    %c0_i32_0 = arith.constant 0 : i32
    %c0_i32_1 = arith.constant 0 : i32
    return %c0_i32, %c0_i32_0 : i32, i32
  }
  func.func @transform_12(%arg0: i32) -> (i32, i32) {
    %c0_i32 = arith.constant 0 : i32
    %c0_i32_0 = arith.constant 0 : i32
    return %arg0, %c0_i32 : i32, i32
  }
  func.func @transform_13(%arg0: i32) -> (i32, i32) {
    %c0_i32 = arith.constant 0 : i32
    %c0_i32_0 = arith.constant 0 : i32
    return %arg0, %c0_i32 : i32, i32
  }
}

</mosaic_0001>

<llo_original>
// kernel: tpu_custom_call.1
$region0: #{tpu_custom_call.1}
  #allocation0 [shape = 'u32[]', space=smem, size = 0x4, offset = 0x4, fixed_abs, tag = 'smem constant byte address 0x4 - core index']
  #allocation1 [shape = 'u32[144,128]{1,0:T(1,128)}', space=vmem, size = 0x12000, scoped, tag = 'internal scratch']
  %s0 = inlined_call_operand.vmem [shape: f32[2,32], index: 0, kind: input, shape index: {}]
  %s1 = inlined_call_operand.hbm [shape: f32[16,32], index: 1, kind: input, shape index: {}]
  %s2 = inlined_call_operand.vmem [shape: f32[32,32], index: 2, kind: input, shape index: {}]
  %s3 = inlined_call_operand.hbm [shape: f32[32,32], index: 3, kind: input, shape index: {}]
  %s4 = inlined_call_operand.hbm [shape: f32[32,32], index: 4, kind: input, shape index: {}]
  %s5 = inlined_call_operand.hbm [shape: f32[1,32], index: 5, kind: input, shape index: {}]
  %s6 = inlined_call_operand.hbm [shape: f32[1,32], index: 6, kind: input, shape index: {}]
  %s7 = inlined_call_operand.hbm [shape: f32[1,32], index: 7, kind: input, shape index: {}]
  %s8 = inlined_call_operand.vmem [shape: f32[32,4], index: 8, kind: input, shape index: {}]
  %s9 = inlined_call_operand.vmem [shape: f32[4,32], index: 9, kind: input, shape index: {}]
  %s10 = inlined_call_operand.vmem [shape: f32[32,32], index: 10, kind: input, shape index: {}]
  %s11 = inlined_call_operand.vmem [shape: f32[1,32], index: 11, kind: input, shape index: {}]
  %s12 = inlined_call_operand.hbm [shape: f32[2,32], index: 12, kind: output, shape index: {0}]
  %s13 = inlined_call_operand.hbm [shape: f32[2,8], index: 13, kind: output, shape index: {1}]
  %14 = xla_tuple %s12, %s13
  %s15 = sld [smem:[#allocation0]]
  $region90: #{tpu_custom_call.1} parent=0
    _
  %s17 = ssub.s32 1, %s15
  %s18 = scalar_select 0, %s17, %s15
  $region1: #{tpu_custom_call.1} parent=0
    #allocation2 [shape = 'u8[8192]{0}', space=vmem, size = 0x2000, scoped, tag = 'input window, operand 1, single buffered']
    #allocation3 [shape = 's32[1]{0}', space=sflag, size = 0x4, scoped, tag = 'scoped memory for tpu_custom_call.1']
    #allocation4 [shape = 's32[1]{0}', space=sflag, size = 0x4, scoped, tag = 'scoped memory for tpu_custom_call.1']
    #allocation5 [shape = 'u8[16384]{0}', space=vmem, size = 0x4000, scoped, tag = 'input window, operand 3, single buffered']
    #allocation6 [shape = 's32[1]{0}', space=sflag, size = 0x4, scoped, tag = 'scoped memory for tpu_custom_call.1']
    #allocation7 [shape = 'u8[16384]{0}', space=vmem, size = 0x4000, scoped, tag = 'input window, operand 4, single buffered']
    #allocation8 [shape = 'u8[512]{0}', space=vmem, size = 0x400, scoped, tag = 'input window, operand 5, single buffered']
    #allocation9 [shape = 's32[1]{0}', space=sflag, size = 0x4, scoped, tag = 'scoped memory for tpu_custom_call.1']
    #allocation10 [shape = 'u8[512]{0}', space=vmem, size = 0x400, scoped, tag = 'input window, operand 6, single buffered']
    #allocation11 [shape = 'u8[512]{0}', space=vmem, size = 0x400, scoped, tag = 'input window, operand 7, single buffered']
    #allocation12 [shape = 's32[1]{0}', space=sflag, size = 0x4, scoped, tag = 'scoped memory for tpu_custom_call.1']
    #allocation13 [shape = 'u8[1024]{0}', space=vmem, size = 0x400, scoped, tag = 'output window, operand 0, single buffered']
    #allocation14 [shape = 'u8[1024]{0}', space=vmem, size = 0x400, scoped, tag = 'output window, operand 1, single buffered']
    #allocation15 [shape = 's32[1]{0}', space=sflag, size = 0x4, scoped, tag = 'scoped memory for tpu_custom_call.1']
    %19 = vsyncpa [#allocation3], 0
    %20 = vsyncpa [#allocation6], 0
    %21 = vsyncpa [#allocation9], 0
    %22 = vsyncpa [#allocation12], 0
    %23 = vsyncpa [#allocation4], 0
    %24 = vsyncpa [#allocation15], 0
    // Predicated region
    $region2: #{tpu_custom_call.1} parent=1 // pred_check
      _
    $region3: #{tpu_custom_call.1} parent=1 // pred_check_branch
      %26 = sbr.rel (0) target = $region5
    $region4: #{tpu_custom_call.1} parent=1 // pred_region
      _
    $region5: #{tpu_custom_call.1} parent=1 // pred_fallthru
      _
    // Predicated region
    $region6: #{tpu_custom_call.1} parent=1 // pred_check
      _
    $region7: #{tpu_custom_call.1} parent=1 // pred_check_branch
      %28 = sbr.rel (0) target = $region9
    $region8: #{tpu_custom_call.1} parent=1 // pred_region
      %s30 = ssub.s32 256, 256
      %31 = vsyncadd [#allocation3], %s30
      %s32 = sshll.u32 [#allocation2], 4
      %s33 = int_to_ptr.vmem [resolvable:$true] %s32
      %38 = dma.hbm_to_vmem [thread:$0]  %s1, 256, %s33, [#allocation3], 128, 128, 8
    $region9: #{tpu_custom_call.1} parent=1 // pred_fallthru
      _
    // Predicated region
    $region10: #{tpu_custom_call.1} parent=1 // pred_check
      _
    $region11: #{tpu_custom_call.1} parent=1 // pred_check_branch
      %40 = sbr.rel (0) target = $region13
    $region12: #{tpu_custom_call.1} parent=1 // pred_region
      _
    $region13: #{tpu_custom_call.1} parent=1 // pred_fallthru
      _
    // Predicated region
    $region14: #{tpu_custom_call.1} parent=1 // pred_check
      _
    $region15: #{tpu_custom_call.1} parent=1 // pred_check_branch
      %42 = sbr.rel (0) target = $region17
    $region16: #{tpu_custom_call.1} parent=1 // pred_region
      %s44 = ssub.s32 512, 512
      %45 = vsyncadd [#allocation6], %s44
      %s46 = sshll.u32 [#allocation5], 4
      %s47 = int_to_ptr.vmem [resolvable:$true] %s46
      %52 = dma.hbm_to_vmem [thread:$0]  %s3, 512, %s47, [#allocation6], 128, 128, 8
    $region17: #{tpu_custom_call.1} parent=1 // pred_fallthru
      _
    // Predicated region
    $region18: #{tpu_custom_call.1} parent=1 // pred_check
      _
    $region19: #{tpu_custom_call.1} parent=1 // pred_check_branch
      %54 = sbr.rel (0) target = $region21
    $region20: #{tpu_custom_call.1} parent=1 // pred_region
      %s56 = ssub.s32 512, 512
      %57 = vsyncadd [#allocation6], %s56
      %s58 = sshll.u32 [#allocation7], 4
      %s59 = int_to_ptr.vmem [resolvable:$true] %s58
      %64 = dma.hbm_to_vmem [thread:$0]  %s4, 512, %s59, [#allocation6], 128, 128, 8
    $region21: #{tpu_custom_call.1} parent=1 // pred_fallthru
      _
    // Predicated region
    $region22: #{tpu_custom_call.1} parent=1 // pred_check
      _
    $region23: #{tpu_custom_call.1} parent=1 // pred_check_branch
      %66 = sbr.rel (0) target = $region25
    $region24: #{tpu_custom_call.1} parent=1 // pred_region
      %s68 = ssub.s32 16, 16
      %69 = vsyncadd [#allocation9], %s68
      %s71 = sshll.u32 [#allocation8], 4
      %s72 = int_to_ptr.vmem [resolvable:$true] %s71
      %74 = dma.hbm_to_vmem [thread:$0]  %s5, 16, %s72, [#allocation9]
    $region25: #{tpu_custom_call.1} parent=1 // pred_fallthru
      _
    // Predicated region
    $region26: #{tpu_custom_call.1} parent=1 // pred_check
      _
    $region27: #{tpu_custom_call.1} parent=1 // pred_check_branch
      %76 = sbr.rel (0) target = $region29
    $region28: #{tpu_custom_call.1} parent=1 // pred_region
      %s78 = ssub.s32 16, 16
      %79 = vsyncadd [#allocation9], %s78
      %s81 = sshll.u32 [#allocation10], 4
      %s82 = int_to_ptr.vmem [resolvable:$true] %s81
      %84 = dma.hbm_to_vmem [thread:$0]  %s6, 16, %s82, [#allocation9]
    $region29: #{tpu_custom_call.1} parent=1 // pred_fallthru
      _
    // Predicated region
    $region30: #{tpu_custom_call.1} parent=1 // pred_check
      _
    $region31: #{tpu_custom_call.1} parent=1 // pred_check_branch
      %86 = sbr.rel (0) target = $region33
    $region32: #{tpu_custom_call.1} parent=1 // pred_region
      %s88 = ssub.s32 16, 16
      %89 = vsyncadd [#allocation12], %s88
      %s91 = sshll.u32 [#allocation11], 4
      %s92 = int_to_ptr.vmem [resolvable:$true] %s91
      %94 = dma.hbm_to_vmem [thread:$0]  %s7, 16, %s92, [#allocation12]
    $region33: #{tpu_custom_call.1} parent=1 // pred_fallthru
      _
    // Predicated region
    $region34: #{tpu_custom_call.1} parent=1 // pred_check
      _
    $region35: #{tpu_custom_call.1} parent=1 // pred_check_branch
      %96 = sbr.rel (0) target = $region37
    $region36: #{tpu_custom_call.1} parent=1 // pred_region
      _
    $region37: #{tpu_custom_call.1} parent=1 // pred_fallthru
      _
    // Predicated region
    $region38: #{tpu_custom_call.1} parent=1 // pred_check
      _
    $region39: #{tpu_custom_call.1} parent=1 // pred_check_branch
      %98 = sbr.rel (0) target = $region41
    $region40: #{tpu_custom_call.1} parent=1 // pred_region
      _
    $region41: #{tpu_custom_call.1} parent=1 // pred_fallthru
      _
    // Predicated region
    $region42: #{tpu_custom_call.1} parent=1 // pred_check
      _
    $region43: #{tpu_custom_call.1} parent=1 // pred_check_branch
      %100 = sbr.rel (0) target = $region45
    $region44: #{tpu_custom_call.1} parent=1 // pred_region
      _
    $region45: #{tpu_custom_call.1} parent=1 // pred_fallthru
      _
    // Predicated region
    $region46: #{tpu_custom_call.1} parent=1 // pred_check
      _
    $region47: #{tpu_custom_call.1} parent=1 // pred_check_branch
      %102 = sbr.rel (0) target = $region49
    $region48: #{tpu_custom_call.1} parent=1 // pred_region
      _
    $region49: #{tpu_custom_call.1} parent=1 // pred_fallthru
      _
    // Predicated region
    $region50: #{tpu_custom_call.1} parent=1 // pred_check
      _
    $region51: #{tpu_custom_call.1} parent=1 // pred_check_branch
      %104 = sbr.rel (0) target = $region53
    $region52: #{tpu_custom_call.1} parent=1 // pred_region
      %105 = dma.done [#allocation3], 256
    $region53: #{tpu_custom_call.1} parent=1 // pred_fallthru
      _
    // Predicated region
    $region54: #{tpu_custom_call.1} parent=1 // pred_check
      _
    $region55: #{tpu_custom_call.1} parent=1 // pred_check_branch
      %107 = sbr.rel (0) target = $region57
    $region56: #{tpu_custom_call.1} parent=1 // pred_region
      %108 = dma.done [#allocation6], 512
    $region57: #{tpu_custom_call.1} parent=1 // pred_fallthru
      _
    // Predicated region
    $region58: #{tpu_custom_call.1} parent=1 // pred_check
      _
    $region59: #{tpu_custom_call.1} parent=1 // pred_check_branch
      %110 = sbr.rel (0) target = $region61
    $region60: #{tpu_custom_call.1} parent=1 // pred_region
      %111 = dma.done [#allocation6], 512
    $region61: #{tpu_custom_call.1} parent=1 // pred_fallthru
      _
    // Predicated region
    $region62: #{tpu_custom_call.1} parent=1 // pred_check
      _
    $region63: #{tpu_custom_call.1} parent=1 // pred_check_branch
      %113 = sbr.rel (0) target = $region65
    $region64: #{tpu_custom_call.1} parent=1 // pred_region
      %114 = dma.done [#allocation9], 16
    $region65: #{tpu_custom_call.1} parent=1 // pred_fallthru
      _
    // Predicated region
    $region66: #{tpu_custom_call.1} parent=1 // pred_check
      _
    $region67: #{tpu_custom_call.1} parent=1 // pred_check_branch
      %116 = sbr.rel (0) target = $region69
    $region68: #{tpu_custom_call.1} parent=1 // pred_region
      %117 = dma.done [#allocation9], 16
    $region69: #{tpu_custom_call.1} parent=1 // pred_fallthru
      _
    // Predicated region
    $region70: #{tpu_custom_call.1} parent=1 // pred_check
      _
    $region71: #{tpu_custom_call.1} parent=1 // pred_check_branch
      %119 = sbr.rel (0) target = $region73
    $region72: #{tpu_custom_call.1} parent=1 // pred_region
      %120 = dma.done [#allocation12], 16
    $region73: #{tpu_custom_call.1} parent=1 // pred_fallthru
      _
    %v121 = vld [vmem:[%s0] sm:$0x3]
    %v122 = vld [vmem:[#allocation2] sm:$0xff]
    %v123 = vld [vmem:[#allocation2 + $0x8] sm:$0xff]
    %v124 = vld [vmem:[%s2] sm:$0xff]
    %v125 = vld [vmem:[%s2 + $0x8] sm:$0xff]
    %v126 = vld [vmem:[%s2 + $0x10] sm:$0xff]
    %v127 = vld [vmem:[%s2 + $0x18] sm:$0xff]
    %v128 = vld [vmem:[#allocation8] sm:$0x1]
    %v130 = vlaneseq
    %v131 = vshrl.u32 %v130, 7
    %v132 = vsub.s32 0, %v131
    %v133 = vrot.slane %v128, %v132
    %vm135 = vcmask 261120
    %v137 = vsel %vm135, %v121, 0
    %139 = vmatprep.subr.mxu0 0.0
    %140 = vmatpush1.msra.mxu0 %v124
    %141 = vmatprep.subr.mxu0 0.0
    %142 = vmatpush1.msra.mxu0 %v125
    %143 = vmatprep.subr.mxu0 0.0
    %144 = vmatpush1.msra.mxu0 %v126
    %145 = vmatprep.subr.mxu0 0.0
    %146 = vmatpush1.msra.mxu0 %v127
    %147 = vmatprep.subr.mxu0 0.0
    %148 = vmatpush1.msra.mxu0 0.0
    %149 = vmatprep.subr.mxu0 0.0
    %150 = vmatpush1.msra.mxu0 0.0
    %151 = vmatprep.subr.mxu0 0.0
    %152 = vmatpush1.msra.mxu0 0.0
    %153 = vmatprep.subr.mxu0 0.0
    %154 = vmatpush1.msra.mxu0 0.0
    %155 = vmatprep.subr.mxu0 0.0
    %156 = vmatpush1.msra.mxu0 0.0
    %157 = vmatprep.subr.mxu0 0.0
    %158 = vmatpush1.msra.mxu0 0.0
    %159 = vmatprep.subr.mxu0 0.0
    %160 = vmatpush1.msra.mxu0 0.0
    %161 = vmatprep.subr.mxu0 0.0
    %162 = vmatpush1.msra.mxu0 0.0
    %163 = vmatprep.subr.mxu0 0.0
    %164 = vmatpush1.msra.mxu0 0.0
    %165 = vmatprep.subr.mxu0 0.0
    %166 = vmatpush1.msra.mxu0 0.0
    %167 = vmatprep.subr.mxu0 0.0
    %168 = vmatpush1.msra.mxu0 0.0
    %169 = vmatprep.subr.mxu0 0.0
    %170 = vmatpush1.msra.mxu0 0.0
    %171 = vmatprep.subr.mxu0 0.0
    %172 = vmatpush1.msra.mxu0 0.0
    %173 = vmatprep.subr.mxu0 0.0
    %174 = vmatpush1.msra.mxu0 0.0
    %175 = vmatprep.subr.mxu0 0.0
    %176 = vmatpush1.msra.mxu0 0.0
    %177 = vmatprep.subr.mxu0 0.0
    %178 = vmatpush1.msra.mxu0 0.0
    %179 = vmatprep.subr.mxu0 0.0
    %180 = vmatpush1.msra.mxu0 0.0
    %181 = vmatprep.subr.mxu0 0.0
    %182 = vmatpush1.msra.mxu0 0.0
    %183 = vmatprep.subr.mxu0 0.0
    %184 = vmatpush1.msra.mxu0 0.0
    %185 = vmatprep.subr.mxu0 0.0
    %186 = vmatpush1.msra.mxu0 0.0
    %187 = vmatprep.subr.mxu0 0.0
    %188 = vmatpush1.msra.mxu0 0.0
    %189 = vmatprep.subr.mxu0 0.0
    %190 = vmatpush1.msra.mxu0 0.0
    %191 = vmatprep.subr.mxu0 0.0
    %192 = vmatpush1.msra.mxu0 0.0
    %193 = vmatprep.subr.mxu0 0.0
    %194 = vmatpush1.msra.mxu0 0.0
    %195 = vmatprep.subr.mxu0 0.0
    %196 = vmatpush1.msra.mxu0 0.0
    %197 = vmatprep.subr.mxu0 0.0
    %198 = vmatpush1.msra.mxu0 0.0
    %199 = vmatprep.subr.mxu0 0.0
    %200 = vmatpush1.msra.mxu0 0.0
    %201 = vmatprep.subr.mxu0 0.0
    %202 = vmatpush1.msra.mxu0 0.0
    %203 = vmatprep.mubr.f32.mxu0 0.0
    %204 = vmatmul.mubr.f32.gmra.mrb[0].mxu0 %v137
    %v205 = vpop.f32.mrb[0].mxu0
    %v206 = vadd.f32 %v133, %v205
    %v207 = vpop.f32.mrb[0].mxu0
    %208 = vdwg.mxu0
    %v209 = vld [vmem:[#allocation5] sm:$0xff]
    %v210 = vld [vmem:[#allocation5 + $0x8] sm:$0xff]
    %v211 = vld [vmem:[#allocation5 + $0x10] sm:$0xff]
    %v212 = vld [vmem:[#allocation5 + $0x18] sm:$0xff]
    %v213 = vld [vmem:[#allocation10] sm:$0x1]
    %v215 = vlaneseq
    %v216 = vshrl.u32 %v215, 7
    %v217 = vsub.s32 0, %v216
    %v218 = vrot.slane %v213, %v217
    %v221 = vsel %vm135, %v122, 0
    %v224 = vsel %vm135, %v123, 0
    %226 = vmatprep.subr.mxu0 0.0
    %227 = vmatpush1.msra.mxu0 %v209
    %228 = vmatprep.subr.mxu0 0.0
    %229 = vmatpush1.msra.mxu0 %v210
    %230 = vmatprep.subr.mxu0 0.0
    %231 = vmatpush1.msra.mxu0 %v211
    %232 = vmatprep.subr.mxu0 0.0
    %233 = vmatpush1.msra.mxu0 %v212
    %234 = vmatprep.subr.mxu0 0.0
    %235 = vmatpush1.msra.mxu0 0.0
    %236 = vmatprep.subr.mxu0 0.0
    %237 = vmatpush1.msra.mxu0 0.0
    %238 = vmatprep.subr.mxu0 0.0
    %239 = vmatpush1.msra.mxu0 0.0
    %240 = vmatprep.subr.mxu0 0.0
    %241 = vmatpush1.msra.mxu0 0.0
    %242 = vmatprep.subr.mxu0 0.0
    %243 = vmatpush1.msra.mxu0 0.0
    %244 = vmatprep.subr.mxu0 0.0
    %245 = vmatpush1.msra.mxu0 0.0
    %246 = vmatprep.subr.mxu0 0.0
    %247 = vmatpush1.msra.mxu0 0.0
    %248 = vmatprep.subr.mxu0 0.0
    %249 = vmatpush1.msra.mxu0 0.0
    %250 = vmatprep.subr.mxu0 0.0
    %251 = vmatpush1.msra.mxu0 0.0
    %252 = vmatprep.subr.mxu0 0.0
    %253 = vmatpush1.msra.mxu0 0.0
    %254 = vmatprep.subr.mxu0 0.0
    %255 = vmatpush1.msra.mxu0 0.0
    %256 = vmatprep.subr.mxu0 0.0
    %257 = vmatpush1.msra.mxu0 0.0
    %258 = vmatprep.subr.mxu0 0.0
    %259 = vmatpush1.msra.mxu0 0.0
    %260 = vmatprep.subr.mxu0 0.0
    %261 = vmatpush1.msra.mxu0 0.0
    %262 = vmatprep.subr.mxu0 0.0
    %263 = vmatpush1.msra.mxu0 0.0
    %264 = vmatprep.subr.mxu0 0.0
    %265 = vmatpush1.msra.mxu0 0.0
    %266 = vmatprep.subr.mxu0 0.0
    %267 = vmatpush1.msra.mxu0 0.0
    %268 = vmatprep.subr.mxu0 0.0
    %269 = vmatpush1.msra.mxu0 0.0
    %270 = vmatprep.subr.mxu0 0.0
    %271 = vmatpush1.msra.mxu0 0.0
    %272 = vmatprep.subr.mxu0 0.0
    %273 = vmatpush1.msra.mxu0 0.0
    %274 = vmatprep.subr.mxu0 0.0
    %275 = vmatpush1.msra.mxu0 0.0
    %276 = vmatprep.subr.mxu0 0.0
    %277 = vmatpush1.msra.mxu0 0.0
    %278 = vmatprep.subr.mxu0 0.0
    %279 = vmatpush1.msra.mxu0 0.0
    %280 = vmatprep.subr.mxu0 0.0
    %281 = vmatpush1.msra.mxu0 0.0
    %282 = vmatprep.subr.mxu0 0.0
    %283 = vmatpush1.msra.mxu0 0.0
    %284 = vmatprep.subr.mxu0 0.0
    %285 = vmatpush1.msra.mxu0 0.0
    %286 = vmatprep.subr.mxu0 0.0
    %287 = vmatpush1.msra.mxu0 0.0
    %288 = vmatprep.subr.mxu0 0.0
    %289 = vmatpush1.msra.mxu0 0.0
    %290 = vmatprep.mubr.f32.mxu0 0.0
    %291 = vmatmul.mubr.f32.gmra.mrb[0].mxu0 %v221
    %v292 = vpop.f32.mrb[0].mxu0
    %v293 = vadd.f32 %v218, %v292
    %v294 = vpop.f32.mrb[0].mxu0
    %295 = vmatprep.mubr.f32.mxu0 0.0
    %296 = vmatmul.mubr.f32.gmra.mrb[0].mxu0 %v224
    %v297 = vpop.f32.mrb[0].mxu0
    %v298 = vadd.f32 %v218, %v297
    %v299 = vpop.f32.mrb[0].mxu0
    %300 = vdwg.mxu0
    %v301 = vld [vmem:[#allocation7] sm:$0xff]
    %v302 = vld [vmem:[#allocation7 + $0x8] sm:$0xff]
    %v303 = vld [vmem:[#allocation7 + $0x10] sm:$0xff]
    %v304 = vld [vmem:[#allocation7 + $0x18] sm:$0xff]
    %v305 = vld [vmem:[#allocation11] sm:$0x1]
    %v307 = vlaneseq
    %v308 = vshrl.u32 %v307, 7
    %v309 = vsub.s32 0, %v308
    %v310 = vrot.slane %v305, %v309
    %312 = vmatprep.subr.mxu0 0.0
    %313 = vmatpush1.msra.mxu0 %v301
    %314 = vmatprep.subr.mxu0 0.0
    %315 = vmatpush1.msra.mxu0 %v302
    %316 = vmatprep.subr.mxu0 0.0
    %317 = vmatpush1.msra.mxu0 %v303
    %318 = vmatprep.subr.mxu0 0.0
    %319 = vmatpush1.msra.mxu0 %v304
    %320 = vmatprep.subr.mxu0 0.0
    %321 = vmatpush1.msra.mxu0 0.0
    %322 = vmatprep.subr.mxu0 0.0
    %323 = vmatpush1.msra.mxu0 0.0
    %324 = vmatprep.subr.mxu0 0.0
    %325 = vmatpush1.msra.mxu0 0.0
    %326 = vmatprep.subr.mxu0 0.0
    %327 = vmatpush1.msra.mxu0 0.0
    %328 = vmatprep.subr.mxu0 0.0
    %329 = vmatpush1.msra.mxu0 0.0
    %330 = vmatprep.subr.mxu0 0.0
    %331 = vmatpush1.msra.mxu0 0.0
    %332 = vmatprep.subr.mxu0 0.0
    %333 = vmatpush1.msra.mxu0 0.0
    %334 = vmatprep.subr.mxu0 0.0
    %335 = vmatpush1.msra.mxu0 0.0
    %336 = vmatprep.subr.mxu0 0.0
    %337 = vmatpush1.msra.mxu0 0.0
    %338 = vmatprep.subr.mxu0 0.0
    %339 = vmatpush1.msra.mxu0 0.0
    %340 = vmatprep.subr.mxu0 0.0
    %341 = vmatpush1.msra.mxu0 0.0
    %342 = vmatprep.subr.mxu0 0.0
    %343 = vmatpush1.msra.mxu0 0.0
    %344 = vmatprep.subr.mxu0 0.0
    %345 = vmatpush1.msra.mxu0 0.0
    %346 = vmatprep.subr.mxu0 0.0
    %347 = vmatpush1.msra.mxu0 0.0
    %348 = vmatprep.subr.mxu0 0.0
    %349 = vmatpush1.msra.mxu0 0.0
    %350 = vmatprep.subr.mxu0 0.0
    %351 = vmatpush1.msra.mxu0 0.0
    %352 = vmatprep.subr.mxu0 0.0
    %353 = vmatpush1.msra.mxu0 0.0
    %354 = vmatprep.subr.mxu0 0.0
    %355 = vmatpush1.msra.mxu0 0.0
    %356 = vmatprep.subr.mxu0 0.0
    %357 = vmatpush1.msra.mxu0 0.0
    %358 = vmatprep.subr.mxu0 0.0
    %359 = vmatpush1.msra.mxu0 0.0
    %360 = vmatprep.subr.mxu0 0.0
    %361 = vmatpush1.msra.mxu0 0.0
    %362 = vmatprep.subr.mxu0 0.0
    %363 = vmatpush1.msra.mxu0 0.0
    %364 = vmatprep.subr.mxu0 0.0
    %365 = vmatpush1.msra.mxu0 0.0
    %366 = vmatprep.subr.mxu0 0.0
    %367 = vmatpush1.msra.mxu0 0.0
    %368 = vmatprep.subr.mxu0 0.0
    %369 = vmatpush1.msra.mxu0 0.0
    %370 = vmatprep.subr.mxu0 0.0
    %371 = vmatpush1.msra.mxu0 0.0
    %372 = vmatprep.subr.mxu0 0.0
    %373 = vmatpush1.msra.mxu0 0.0
    %374 = vmatprep.subr.mxu0 0.0
    %375 = vmatpush1.msra.mxu0 0.0
    %376 = vmatprep.mubr.f32.mxu0 0.0
    %377 = vmatmul.mubr.f32.gmra.mrb[0].mxu0 %v221
    %v378 = vpop.f32.mrb[0].mxu0
    %v379 = vadd.f32 %v310, %v378
    %v380 = vpop.f32.mrb[0].mxu0
    %381 = vmatprep.mubr.f32.mxu0 0.0
    %382 = vmatmul.mubr.f32.gmra.mrb[0].mxu0 %v224
    %v383 = vpop.f32.mrb[0].mxu0
    %v384 = vadd.f32 %v310, %v383
    %v385 = vpop.f32.mrb[0].mxu0
    %386 = vdwg.mxu0
    %v389 = vunpack.c.l.s4 1966171168
    %v390 = vunpack.c.0.s8 %v389
    %v391 = vlaneseq
    %v392 = vshrl.u32 %v391, 7
    %v393 = vsub.s32 %v390, %v392
    %v394 = vrot.slane %v206, %v393
    %v395 = vcombine.high %v394, %v394
    %v397 = vunpack.c.l.s4 1966171168
    %v398 = vunpack.c.0.s8 %v397
    %v399 = vlaneseq
    %v400 = vshrl.u32 %v399, 7
    %v401 = vsub.s32 %v398, %v400
    %v402 = vrot.slane %v394, %v401
    %v404 = vunpack.c.l.s4 1966171168
    %v405 = vunpack.c.0.s8 %v404
    %v406 = vlaneseq
    %v407 = vshrl.u32 %v406, 7
    %v408 = vsub.s32 %v405, %v407
    %v409 = vrot.slane %v395, %v408
    %v410 = vlaneseq
    %v411 = vshrl.u32 %v410, 7
    %v412 = vsub.s32 0, %v411
    %v413 = vrot.slane %v402, %v412
    %v414 = vlaneseq
    %v415 = vshrl.u32 %v414, 7
    %v416 = vsub.s32 0, %v415
    %v417 = vrot.slane %v409, %v416
    %v420 = vmul.f32 %v413, %v293
    %v421 = vmul.f32 %v417, %v298
    %v422 = vld [vmem:[%s8] sm:$0xff]
    %v423 = vld [vmem:[%s8 + $0x8] sm:$0xff]
    %v424 = vld [vmem:[%s8 + $0x10] sm:$0xff]
    %v425 = vld [vmem:[%s8 + $0x18] sm:$0xff]
    %v427 = vsel %vm135, %v420, 0
    %v430 = vsel %vm135, %v421, 0
    %432 = vmatprep.subr.mxu0 0.0
    %433 = vmatpush1.msra.mxu0 %v422
    %434 = vmatprep.subr.mxu0 0.0
    %435 = vmatpush1.msra.mxu0 %v423
    %436 = vmatprep.subr.mxu0 0.0
    %437 = vmatpush1.msra.mxu0 %v424
    %438 = vmatprep.subr.mxu0 0.0
    %439 = vmatpush1.msra.mxu0 %v425
    %440 = vmatprep.subr.mxu0 0.0
    %441 = vmatpush1.msra.mxu0 0.0
    %442 = vmatprep.subr.mxu0 0.0
    %443 = vmatpush1.msra.mxu0 0.0
    %444 = vmatprep.subr.mxu0 0.0
    %445 = vmatpush1.msra.mxu0 0.0
    %446 = vmatprep.subr.mxu0 0.0
    %447 = vmatpush1.msra.mxu0 0.0
    %448 = vmatprep.subr.mxu0 0.0
    %449 = vmatpush1.msra.mxu0 0.0
    %450 = vmatprep.subr.mxu0 0.0
    %451 = vmatpush1.msra.mxu0 0.0
    %452 = vmatprep.subr.mxu0 0.0
    %453 = vmatpush1.msra.mxu0 0.0
    %454 = vmatprep.subr.mxu0 0.0
    %455 = vmatpush1.msra.mxu0 0.0
    %456 = vmatprep.subr.mxu0 0.0
    %457 = vmatpush1.msra.mxu0 0.0
    %458 = vmatprep.subr.mxu0 0.0
    %459 = vmatpush1.msra.mxu0 0.0
    %460 = vmatprep.subr.mxu0 0.0
    %461 = vmatpush1.msra.mxu0 0.0
    %462 = vmatprep.subr.mxu0 0.0
    %463 = vmatpush1.msra.mxu0 0.0
    %464 = vmatprep.subr.mxu0 0.0
    %465 = vmatpush1.msra.mxu0 0.0
    %466 = vmatprep.subr.mxu0 0.0
    %467 = vmatpush1.msra.mxu0 0.0
    %468 = vmatprep.subr.mxu0 0.0
    %469 = vmatpush1.msra.mxu0 0.0
    %470 = vmatprep.subr.mxu0 0.0
    %471 = vmatpush1.msra.mxu0 0.0
    %472 = vmatprep.subr.mxu0 0.0
    %473 = vmatpush1.msra.mxu0 0.0
    %474 = vmatprep.subr.mxu0 0.0
    %475 = vmatpush1.msra.mxu0 0.0
    %476 = vmatprep.subr.mxu0 0.0
    %477 = vmatpush1.msra.mxu0 0.0
    %478 = vmatprep.subr.mxu0 0.0
    %479 = vmatpush1.msra.mxu0 0.0
    %480 = vmatprep.subr.mxu0 0.0
    %481 = vmatpush1.msra.mxu0 0.0
    %482 = vmatprep.subr.mxu0 0.0
    %483 = vmatpush1.msra.mxu0 0.0
    %484 = vmatprep.subr.mxu0 0.0
    %485 = vmatpush1.msra.mxu0 0.0
    %486 = vmatprep.subr.mxu0 0.0
    %487 = vmatpush1.msra.mxu0 0.0
    %488 = vmatprep.subr.mxu0 0.0
    %489 = vmatpush1.msra.mxu0 0.0
    %490 = vmatprep.subr.mxu0 0.0
    %491 = vmatpush1.msra.mxu0 0.0
    %492 = vmatprep.subr.mxu0 0.0
    %493 = vmatpush1.msra.mxu0 0.0
    %494 = vmatprep.subr.mxu0 0.0
    %495 = vmatpush1.msra.mxu0 0.0
    %496 = vmatprep.mubr.f32.mxu0 0.0
    %497 = vmatmul.mubr.f32.gmra.mrb[0].mxu0 %v427
    %v498 = vpop.f32.mrb[0].mxu0
    %v499 = vadd.f32 0.0, %v498
    %v500 = vpop.f32.mrb[0].mxu0
    %501 = vmatprep.mubr.f32.mxu0 0.0
    %502 = vmatmul.mubr.f32.gmra.mrb[0].mxu0 %v430
    %v503 = vpop.f32.mrb[0].mxu0
    %v504 = vadd.f32 0.0, %v503
    %v505 = vpop.f32.mrb[0].mxu0
    %506 = vdwg.mxu0
    %vm507 = vcmask 31744
    %v508 = vsel %vm507, %v499, -inf
    %v509 = vrot.slane %v508, 4
    %v510 = vmax.f32 %v508, %v509
    %v511 = vrot.slane %v510, 2
    %v512 = vmax.f32 %v510, %v511
    %v513 = vrot.slane %v512, 1
    %v514 = vmax.f32 %v512, %v513
    %v515 = vsel %vm507, %v504, -inf
    %v516 = vrot.slane %v515, 4
    %v517 = vmax.f32 %v515, %v516
    %v518 = vrot.slane %v517, 2
    %v519 = vmax.f32 %v517, %v518
    %v520 = vrot.slane %v519, 1
    %v521 = vmax.f32 %v519, %v520
    %v522 = vsub.f32 %v499, %v514
    %v523 = vsub.f32 %v504, %v521
    %v524 = vmul.f32 %v522, 1.442695
    %v525 = vpow.pop %v524
    %v526 = vmul.f32 %v523, 1.442695
    %v527 = vpow.pop %v526
    %v528 = vsel %vm507, %v525, 0.0
    %v529 = vrot.slane %v528, 4
    %v530 = vadd.f32 %v528, %v529
    %v531 = vrot.slane %v530, 2
    %v532 = vadd.f32 %v530, %v531
    %v533 = vrot.slane %v532, 1
    %v534 = vadd.f32 %v532, %v533
    %v535 = vsel %vm507, %v527, 0.0
    %v536 = vrot.slane %v535, 4
    %v537 = vadd.f32 %v535, %v536
    %v538 = vrot.slane %v537, 2
    %v539 = vadd.f32 %v537, %v538
    %v540 = vrot.slane %v539, 1
    %v541 = vadd.f32 %v539, %v540
    %v542 = vrcp.pop %v534
    %v543 = vmul.f32 %v525, %v542
    %v544 = vrcp.pop %v541
    %v545 = vmul.f32 %v527, %v544
    %v546 = vsel %vm507, %v543, 0.0
    %547 = vadd.xlane.f32.xlu0 %v546
    %v548 = vpop.xlane.xlu0 %547
    %v549 = vsel %vm507, %v545, 0.0
    %550 = vadd.xlane.f32.xlu0 %v549
    %v551 = vpop.xlane.xlu0 %550
    %v552 = vmul.f32 %v548, 0.25
    %v553 = vmul.f32 %v551, 0.25
    %v556 = vlaneseq
    %v557 = vand.u32 %v556, 127
    %v558 = vlaneseq
    %v559 = vshrl.u32 %v558, 7
    %v560 = vsub.s32 %v557, %v559
    %v561 = vrot.slane %v552, %v560
    %v562 = vlaneseq
    %v563 = vshrl.u32 %v562, 7
    %v564 = vsub.s32 %v557, %v563
    %v565 = vrot.slane %v553, %v564
    %vm566 = vcmask 1041409
    %v567 = vsel %vm566, %v565, %v561
    %vm569 = vcmask 58368
    %570 = vst.msk [vmem:[#allocation14] sm:$0x3] %vm569, %v567
    %v571 = vld [vmem:[%s9] sm:$0xf]
    %v573 = vsel %vm507, %v543, 0
    %v576 = vsel %vm507, %v545, 0
    %vm578 = vcmask 1043456
    %v580 = vsel %vm578, %v571, 0
    %582 = vmatprep.subr.mxu0 0.0
    %583 = vmatpush1.msra.mxu0 %v580
    %584 = vmatprep.subr.mxu0 0.0
    %585 = vmatpush1.msra.mxu0 0.0
    %586 = vmatprep.subr.mxu0 0.0
    %587 = vmatpush1.msra.mxu0 0.0
    %588 = vmatprep.subr.mxu0 0.0
    %589 = vmatpush1.msra.mxu0 0.0
    %590 = vmatprep.subr.mxu0 0.0
    %591 = vmatpush1.msra.mxu0 0.0
    %592 = vmatprep.subr.mxu0 0.0
    %593 = vmatpush1.msra.mxu0 0.0
    %594 = vmatprep.subr.mxu0 0.0
    %595 = vmatpush1.msra.mxu0 0.0
    %596 = vmatprep.subr.mxu0 0.0
    %597 = vmatpush1.msra.mxu0 0.0
    %598 = vmatprep.subr.mxu0 0.0
    %599 = vmatpush1.msra.mxu0 0.0
    %600 = vmatprep.subr.mxu0 0.0
    %601 = vmatpush1.msra.mxu0 0.0
    %602 = vmatprep.subr.mxu0 0.0
    %603 = vmatpush1.msra.mxu0 0.0
    %604 = vmatprep.subr.mxu0 0.0
    %605 = vmatpush1.msra.mxu0 0.0
    %606 = vmatprep.subr.mxu0 0.0
    %607 = vmatpush1.msra.mxu0 0.0
    %608 = vmatprep.subr.mxu0 0.0
    %609 = vmatpush1.msra.mxu0 0.0
    %610 = vmatprep.subr.mxu0 0.0
    %611 = vmatpush1.msra.mxu0 0.0
    %612 = vmatprep.subr.mxu0 0.0
    %613 = vmatpush1.msra.mxu0 0.0
    %614 = vmatprep.subr.mxu0 0.0
    %615 = vmatpush1.msra.mxu0 0.0
    %616 = vmatprep.subr.mxu0 0.0
    %617 = vmatpush1.msra.mxu0 0.0
    %618 = vmatprep.subr.mxu0 0.0
    %619 = vmatpush1.msra.mxu0 0.0
    %620 = vmatprep.subr.mxu0 0.0
    %621 = vmatpush1.msra.mxu0 0.0
    %622 = vmatprep.subr.mxu0 0.0
    %623 = vmatpush1.msra.mxu0 0.0
    %624 = vmatprep.subr.mxu0 0.0
    %625 = vmatpush1.msra.mxu0 0.0
    %626 = vmatprep.subr.mxu0 0.0
    %627 = vmatpush1.msra.mxu0 0.0
    %628 = vmatprep.subr.mxu0 0.0
    %629 = vmatpush1.msra.mxu0 0.0
    %630 = vmatprep.subr.mxu0 0.0
    %631 = vmatpush1.msra.mxu0 0.0
    %632 = vmatprep.subr.mxu0 0.0
    %633 = vmatpush1.msra.mxu0 0.0
    %634 = vmatprep.subr.mxu0 0.0
    %635 = vmatpush1.msra.mxu0 0.0
    %636 = vmatprep.subr.mxu0 0.0
    %637 = vmatpush1.msra.mxu0 0.0
    %638 = vmatprep.subr.mxu0 0.0
    %639 = vmatpush1.msra.mxu0 0.0
    %640 = vmatprep.subr.mxu0 0.0
    %641 = vmatpush1.msra.mxu0 0.0
    %642 = vmatprep.subr.mxu0 0.0
    %643 = vmatpush1.msra.mxu0 0.0
    %644 = vmatprep.subr.mxu0 0.0
    %645 = vmatpush1.msra.mxu0 0.0
    %646 = vmatprep.mubr.f32.mxu0 0.0
    %647 = vmatmul.mubr.f32.gmra.mrb[0].mxu0 %v573
    %v648 = vpop.f32.mrb[0].mxu0
    %v649 = vadd.f32 0.0, %v648
    %v650 = vpop.f32.mrb[0].mxu0
    %651 = vmatprep.mubr.f32.mxu0 0.0
    %652 = vmatmul.mubr.f32.gmra.mrb[0].mxu0 %v576
    %v653 = vpop.f32.mrb[0].mxu0
    %v654 = vadd.f32 0.0, %v653
    %v655 = vpop.f32.mrb[0].mxu0
    %656 = vdwg.mxu0
    %v657 = vmul.f32 %v649, %v379
    %v658 = vmul.f32 %v654, %v384
    %v659 = vsel %vm135, %v657, 0.0
    %v660 = vrot.slane %v659, 4
    %v661 = vadd.f32 %v659, %v660
    %v662 = vrot.slane %v661, 2
    %v663 = vadd.f32 %v661, %v662
    %v664 = vrot.slane %v663, 1
    %v665 = vadd.f32 %v663, %v664
    %v666 = vsel %vm135, %v658, 0.0
    %v667 = vrot.slane %v666, 4
    %v668 = vadd.f32 %v666, %v667
    %v669 = vrot.slane %v668, 2
    %v670 = vadd.f32 %v668, %v669
    %v671 = vrot.slane %v670, 1
    %v672 = vadd.f32 %v670, %v671
    %v673 = vld [vmem:[%s10] sm:$0xff]
    %v674 = vld [vmem:[%s10 + $0x8] sm:$0xff]
    %v675 = vld [vmem:[%s10 + $0x10] sm:$0xff]
    %v676 = vld [vmem:[%s10 + $0x18] sm:$0xff]
    %v677 = vld [vmem:[%s11] sm:$0x1]
    %v679 = vlaneseq
    %v680 = vshrl.u32 %v679, 7
    %v681 = vsub.s32 0, %v680
    %v682 = vrot.slane %v677, %v681
    %v686 = vsel %vm566, %v672, %v665
    %v687 = vsel %vm135, %v686, 0
    %689 = vmatprep.subr.mxu0 0.0
    %690 = vmatpush1.msra.mxu0 %v673
    %691 = vmatprep.subr.mxu0 0.0
    %692 = vmatpush1.msra.mxu0 %v674
    %693 = vmatprep.subr.mxu0 0.0
    %694 = vmatpush1.msra.mxu0 %v675
    %695 = vmatprep.subr.mxu0 0.0
    %696 = vmatpush1.msra.mxu0 %v676
    %697 = vmatprep.subr.mxu0 0.0
    %698 = vmatpush1.msra.mxu0 0.0
    %699 = vmatprep.subr.mxu0 0.0
    %700 = vmatpush1.msra.mxu0 0.0
    %701 = vmatprep.subr.mxu0 0.0
    %702 = vmatpush1.msra.mxu0 0.0
    %703 = vmatprep.subr.mxu0 0.0
    %704 = vmatpush1.msra.mxu0 0.0
    %705 = vmatprep.subr.mxu0 0.0
    %706 = vmatpush1.msra.mxu0 0.0
    %707 = vmatprep.subr.mxu0 0.0
    %708 = vmatpush1.msra.mxu0 0.0
    %709 = vmatprep.subr.mxu0 0.0
    %710 = vmatpush1.msra.mxu0 0.0
    %711 = vmatprep.subr.mxu0 0.0
    %712 = vmatpush1.msra.mxu0 0.0
    %713 = vmatprep.subr.mxu0 0.0
    %714 = vmatpush1.msra.mxu0 0.0
    %715 = vmatprep.subr.mxu0 0.0
    %716 = vmatpush1.msra.mxu0 0.0
    %717 = vmatprep.subr.mxu0 0.0
    %718 = vmatpush1.msra.mxu0 0.0
    %719 = vmatprep.subr.mxu0 0.0
    %720 = vmatpush1.msra.mxu0 0.0
    %721 = vmatprep.subr.mxu0 0.0
    %722 = vmatpush1.msra.mxu0 0.0
    %723 = vmatprep.subr.mxu0 0.0
    %724 = vmatpush1.msra.mxu0 0.0
    %725 = vmatprep.subr.mxu0 0.0
    %726 = vmatpush1.msra.mxu0 0.0
    %727 = vmatprep.subr.mxu0 0.0
    %728 = vmatpush1.msra.mxu0 0.0
    %729 = vmatprep.subr.mxu0 0.0
    %730 = vmatpush1.msra.mxu0 0.0
    %731 = vmatprep.subr.mxu0 0.0
    %732 = vmatpush1.msra.mxu0 0.0
    %733 = vmatprep.subr.mxu0 0.0
    %734 = vmatpush1.msra.mxu0 0.0
    %735 = vmatprep.subr.mxu0 0.0
    %736 = vmatpush1.msra.mxu0 0.0
    %737 = vmatprep.subr.mxu0 0.0
    %738 = vmatpush1.msra.mxu0 0.0
    %739 = vmatprep.subr.mxu0 0.0
    %740 = vmatpush1.msra.mxu0 0.0
    %741 = vmatprep.subr.mxu0 0.0
    %742 = vmatpush1.msra.mxu0 0.0
    %743 = vmatprep.subr.mxu0 0.0
    %744 = vmatpush1.msra.mxu0 0.0
    %745 = vmatprep.subr.mxu0 0.0
    %746 = vmatpush1.msra.mxu0 0.0
    %747 = vmatprep.subr.mxu0 0.0
    %748 = vmatpush1.msra.mxu0 0.0
    %749 = vmatprep.subr.mxu0 0.0
    %750 = vmatpush1.msra.mxu0 0.0
    %751 = vmatprep.subr.mxu0 0.0
    %752 = vmatpush1.msra.mxu0 0.0
    %753 = vmatprep.mubr.f32.mxu0 0.0
    %754 = vmatmul.mubr.f32.gmra.mrb[0].mxu0 %v687
    %v755 = vpop.f32.mrb[0].mxu0
    %v756 = vadd.f32 %v682, %v755
    %v757 = vpop.f32.mrb[0].mxu0
    %758 = vdwg.mxu0
    %vm759 = vcmask 254976
    %760 = vst.msk [vmem:[#allocation13] sm:$0x3] %vm759, %v756
    // Predicated region
    $region74: #{tpu_custom_call.1} parent=1 // pred_check
      _
    $region75: #{tpu_custom_call.1} parent=1 // pred_check_branch
      %762 = sbr.rel (0) target = $region77
    $region76: #{tpu_custom_call.1} parent=1 // pred_region
      %s764 = ssub.s32 32, 32
      %765 = vsyncadd [#allocation4], %s764
      %s767 = sshll.u32 [#allocation13], 4
      %s768 = int_to_ptr.vmem [resolvable:$true] %s767
      %770 = dma.vmem_to_hbm [thread:$0]  %s768, 32, %s12, [#allocation4]
    $region77: #{tpu_custom_call.1} parent=1 // pred_fallthru
      _
    // Predicated region
    $region78: #{tpu_custom_call.1} parent=1 // pred_check
      _
    $region79: #{tpu_custom_call.1} parent=1 // pred_check_branch
      %772 = sbr.rel (0) target = $region81
    $region80: #{tpu_custom_call.1} parent=1 // pred_region
      %s774 = ssub.s32 32, 32
      %775 = vsyncadd [#allocation15], %s774
      %s777 = sshll.u32 [#allocation14], 4
      %s778 = int_to_ptr.vmem [resolvable:$true] %s777
      %780 = dma.vmem_to_hbm [thread:$0]  %s778, 32, %s13, [#allocation15]
    $region81: #{tpu_custom_call.1} parent=1 // pred_fallthru
      _
    // Predicated region
    $region82: #{tpu_custom_call.1} parent=1 // pred_check
      _
    $region83: #{tpu_custom_call.1} parent=1 // pred_check_branch
      %782 = sbr.rel (0) target = $region85
    $region84: #{tpu_custom_call.1} parent=1 // pred_region
      %783 = dma.done [#allocation4], 32
    $region85: #{tpu_custom_call.1} parent=1 // pred_fallthru
      _
    // Predicated region
    $region86: #{tpu_custom_call.1} parent=1 // pred_check
      _
    $region87: #{tpu_custom_call.1} parent=1 // pred_check_branch
      %785 = sbr.rel (0) target = $region89
    $region88: #{tpu_custom_call.1} parent=1 // pred_region
      %786 = dma.done [#allocation15], 32
    $region89: #{tpu_custom_call.1} parent=1 // pred_fallthru
      _
    %787 = vsyncpa [#allocation3], 1
    %788 = vsyncpa [#allocation6], 1
    %789 = vsyncpa [#allocation9], 1
    %790 = vsyncpa [#allocation12], 1
    %791 = vsyncpa [#allocation4], 1
    %792 = vsyncpa [#allocation15], 1

</llo_original>
